<compile_context>
chip_gen: v7x
topology: tpu7x:2x2x1
jax: 0.10.0
libtpu: 0.0.40
codegen_flags: <defaults>
</compile_context>

<pallas_src>
import jax
import jax.numpy as jnp
from jax.experimental import pallas as pl
from jax.experimental.pallas import tpu as pltpu


def _round_up(x, m):
    return ((x + m - 1) // m) * m


def _head_kernel(x_ref, dw_ref, db_ref, ow_ref, ob_ref, out_ref, acc_ref):
    k = pl.program_id(0)

    @pl.when(k == 0)
    def _():
        acc_ref[...] = jnp.zeros_like(acc_ref)

    # dense slab: h_tile = tanh(x @ W_d[:, k*tn:(k+1)*tn] + b_d[tile]); f32 math.
    h = jnp.dot(x_ref[...], dw_ref[...], preferred_element_type=jnp.float32)
    h = jnp.tanh(h + db_ref[...])

    # out_proj partial sum: acc += h_tile @ W_o[k*tn:(k+1)*tn, :]
    acc_ref[...] += jnp.dot(h.astype(ow_ref.dtype), ow_ref[...],
                            preferred_element_type=jnp.float32)

    @pl.when(k == pl.num_programs(0) - 1)
    def _():
        out_ref[...] = (acc_ref[...] + ob_ref[...]).astype(out_ref.dtype)


def classification_head_batched(x, dense_w, dense_b, out_w, out_b,
                                *, weight_dtype=jnp.bfloat16):
    """x: (B, H) CLS rows.  Weights stored as [in, out] (= W^T of torch Linear).
    Returns (B, L) float32 logits."""
    B, H = x.shape
    L = out_w.shape[1]

    # Lane/sublane-friendly padding: lane-dense output, sublane-dense batch.
    B_pad = _round_up(max(B, 1), 8)
    L_pad = _round_up(max(L, 1), 128)

    # Tile along the dense-output dim (also the out_proj reduction dim).
    tn = H
    for cand in (512, 256, 128):
        if H % cand == 0 and H >= cand:
            tn = cand
            break
    n_steps = H // tn

    # Parameter prep: bf16 weights/activations (HBM-bound GEMV), f32 biases.
    x_p = jnp.zeros((B_pad, H), weight_dtype).at[:B, :].set(x.astype(weight_dtype))
    dw = dense_w.astype(weight_dtype)                                    # (H, H)
    db = dense_b.reshape(1, H).astype(jnp.float32)                       # (1, H)
    ow = jnp.zeros((H, L_pad), weight_dtype).at[:, :L].set(out_w.astype(weight_dtype))
    ob = jnp.zeros((1, L_pad), jnp.float32).at[0, :L].set(out_b.astype(jnp.float32))

    out = pl.pallas_call(
        _head_kernel,
        out_shape=jax.ShapeDtypeStruct((B_pad, L_pad), jnp.float32),
        grid_spec=pltpu.PrefetchScalarGridSpec(
            num_scalar_prefetch=0,
            grid=(n_steps,),
            in_specs=[
                pl.BlockSpec((B_pad, H), lambda k: (0, 0)),     # x: resident
                pl.BlockSpec((H, tn), lambda k: (0, k)),        # dense_w column slab
                pl.BlockSpec((1, tn), lambda k: (0, k)),        # dense_b slab
                pl.BlockSpec((tn, L_pad), lambda k: (k, 0)),    # out_w row slab
                pl.BlockSpec((1, L_pad), lambda k: (0, 0)),     # out_b: resident
            ],
            out_specs=pl.BlockSpec((B_pad, L_pad), lambda k: (0, 0)),
            scratch_shapes=[pltpu.VMEM((B_pad, L_pad), jnp.float32)],
        ),
        compiler_params=pltpu.CompilerParams(
            # Single grid axis is the out_proj accumulation axis -> arbitrary.
            dimension_semantics=("arbitrary",),
        ),
    )(x_p, dw, db, ow, ob)
    return out[:B, :L]


def roberta_classification_head(features, dense_w, dense_b, out_w, out_b,
                                *, weight_dtype=jnp.bfloat16):
    """Matches the PyTorch module: features[0, :] -> dense -> tanh -> out_proj.
    features: [S, H]; returns [L] float32."""
    x = features[0:1, :]   # only the CLS row is ever DMA'd into the kernel
    y = classification_head_batched(x, dense_w, dense_b, out_w, out_b,
                                    weight_dtype=weight_dtype)
    return y[0]


if __name__ == "__main__":
    # Small shapes consistent with the module: seq=8, hidden=32, num_labels=4
    S, H, L = 8, 32, 4
    key = jax.random.PRNGKey(0)
    k_feat, k_dw, k_db, k_ow, k_ob, k_batch = jax.random.split(key, 6)

    features = jax.random.normal(k_feat, (S, H), dtype=jnp.float32)
    # Parameters stored as [in, out] = W^T of the torch Linear weights.
    dense_w = jax.random.normal(k_dw, (H, H), dtype=jnp.float32) * 0.05
    dense_b = jax.random.normal(k_db, (H,), dtype=jnp.float32) * 0.05
    out_w = jax.random.normal(k_ow, (H, L), dtype=jnp.float32) * 0.05
    out_b = jax.random.normal(k_ob, (L,), dtype=jnp.float32) * 0.05

    # Module-semantics call (B=1, CLS row of `features`).
    y = roberta_classification_head(features, dense_w, dense_b, out_w, out_b)
    jax.block_until_ready(y)

    # Pure-JAX f32 reference of the same semantics (bf16 weights -> relaxed tol).
    x0 = features[0, :]
    ref = jnp.tanh(x0 @ dense_w + dense_b) @ out_w + out_b
    assert y.shape == (L,)
    assert jnp.allclose(y, ref, atol=2e-2, rtol=2e-2)

    # Batched path (amortizes the weight stream across CLS rows).
    B = 4
    xb = jax.random.normal(k_batch, (B, H), dtype=jnp.float32)
    yb = classification_head_batched(xb, dense_w, dense_b, out_w, out_b)
    jax.block_until_ready(yb)
    refb = jnp.tanh(xb @ dense_w + dense_b) @ out_w + out_b
    assert yb.shape == (B, L)
    assert jnp.allclose(yb, refb, atol=2e-2, rtol=2e-2)

    print("KERNEL_OK")
</pallas_src>

<mosaic_0001>
module attributes {stable_mosaic.version = 11 : i64} {
  func.func @_head_kernel(%arg0: i32, %arg1: memref<8x32xbf16, #tpu.memory_space<vmem>>, %arg2: memref<32x32xbf16, #tpu.memory_space<vmem>>, %arg3: memref<1x32xf32, #tpu.memory_space<vmem>>, %arg4: memref<32x128xbf16, #tpu.memory_space<vmem>>, %arg5: memref<1x128xf32, #tpu.memory_space<vmem>>, %arg6: memref<8x128xf32, #tpu.memory_space<vmem>>, %arg7: memref<8x128xf32, #tpu.memory_space<vmem>>) attributes {dimension_semantics = [#tpu.dimension_semantics<arbitrary>], iteration_bounds = array<i64: 1>, scalar_prefetch = 0 : i64, scratch_operands = 1 : i64, tpu.core_type = #tpu.core_type<tc>, window_params = [{pipeline_mode = #tpu.pipeline_mode<synchronous>, transform_indices = @transform_0, window_bounds = array<i64: 8, 32>}, {transform_indices = @transform_1, window_bounds = array<i64: 32, 32>}, {transform_indices = @transform_2, window_bounds = array<i64: 1, 32>}, {transform_indices = @transform_3, window_bounds = array<i64: 32, 128>}, {pipeline_mode = #tpu.pipeline_mode<synchronous>, transform_indices = @transform_4, window_bounds = array<i64: 1, 128>}, {pipeline_mode = #tpu.pipeline_mode<synchronous>, transform_indices = @transform_5, window_bounds = array<i64: 8, 128>}]} {
    %c0_i32 = arith.constant 0 : i32
    %0 = arith.cmpi eq, %arg0, %c0_i32 : i32
    %1 = arith.extui %0 : i1 to i32
    %c0_i32_0 = arith.constant 0 : i32
    %2 = arith.cmpi ne, %1, %c0_i32_0 : i32
    scf.if %2 {
      %cst_15 = arith.constant 0.000000e+00 : f32
      %19 = vector.broadcast %cst_15 : f32 to vector<8x128xf32>
      %c0_16 = arith.constant 0 : index
      %c0_17 = arith.constant 0 : index
      %20 = vector.load %arg7[%c0_16, %c0_17] : memref<8x128xf32, #tpu.memory_space<vmem>>, vector<8x128xf32>
      tpu.vector_store %arg7[%c0_16, %c0_17], %19 {strides = array<i32>} : memref<8x128xf32, #tpu.memory_space<vmem>>, vector<8x128xf32>,
    } else {
    }
    %c0 = arith.constant 0 : index
    %c0_1 = arith.constant 0 : index
    %3 = vector.load %arg1[%c0, %c0_1] : memref<8x32xbf16, #tpu.memory_space<vmem>>, vector<8x32xbf16>
    %c0_2 = arith.constant 0 : index
    %c0_3 = arith.constant 0 : index
    %4 = vector.load %arg2[%c0_2, %c0_3] : memref<32x32xbf16, #tpu.memory_space<vmem>>, vector<32x32xbf16>
    %cst = arith.constant dense<0.000000e+00> : vector<8x32xf32>
    %5 = tpu.matmul %3, %4, %cst {dimension_numbers = #tpu.dot_dimension_numbers<[1], [0], [0], [1], [0, 0, 1, 1], [], []>} : vector<8x32xbf16>, vector<32x32xbf16>, vector<8x32xf32> -> vector<8x32xf32>
    %c0_4 = arith.constant 0 : index
    %c0_5 = arith.constant 0 : index
    %6 = vector.load %arg3[%c0_4, %c0_5] : memref<1x32xf32, #tpu.memory_space<vmem>>, vector<1x32xf32>
    %7 = vector.broadcast %6 : vector<1x32xf32> to vector<8x32xf32>
    %8 = arith.addf %5, %7 : vector<8x32xf32>
    %9 = math.tanh %8 : vector<8x32xf32>
    %c0_6 = arith.constant 0 : index
    %c0_7 = arith.constant 0 : index
    %10 = vector.load %arg7[%c0_6, %c0_7] : memref<8x128xf32, #tpu.memory_space<vmem>>, vector<8x128xf32>
    %11 = arith.truncf %9 : vector<8x32xf32> to vector<8x32xbf16>
    %c0_8 = arith.constant 0 : index
    %c0_9 = arith.constant 0 : index
    %12 = vector.load %arg4[%c0_8, %c0_9] : memref<32x128xbf16, #tpu.memory_space<vmem>>, vector<32x128xbf16>
    %cst_10 = arith.constant dense<0.000000e+00> : vector<8x128xf32>
    %13 = tpu.matmul %11, %12, %cst_10 {dimension_numbers = #tpu.dot_dimension_numbers<[1], [0], [0], [1], [0, 0, 1, 1], [], []>} : vector<8x32xbf16>, vector<32x128xbf16>, vector<8x128xf32> -> vector<8x128xf32>
    %14 = arith.addf %10, %13 : vector<8x128xf32>
    %c0_11 = arith.constant 0 : index
    %c0_12 = arith.constant 0 : index
    %15 = vector.load %arg7[%c0_11, %c0_12] : memref<8x128xf32, #tpu.memory_space<vmem>>, vector<8x128xf32>
    tpu.vector_store %arg7[%c0_11, %c0_12], %14 {strides = array<i32>} : memref<8x128xf32, #tpu.memory_space<vmem>>, vector<8x128xf32>,
    %c0_i32_13 = arith.constant 0 : i32
    %16 = arith.cmpi eq, %arg0, %c0_i32_13 : i32
    %17 = arith.extui %16 : i1 to i32
    %c0_i32_14 = arith.constant 0 : i32
    %18 = arith.cmpi ne, %17, %c0_i32_14 : i32
    scf.if %18 {
      %c0_15 = arith.constant 0 : index
      %c0_16 = arith.constant 0 : index
      %19 = vector.load %arg7[%c0_15, %c0_16] : memref<8x128xf32, #tpu.memory_space<vmem>>, vector<8x128xf32>
      %c0_17 = arith.constant 0 : index
      %c0_18 = arith.constant 0 : index
      %20 = vector.load %arg5[%c0_17, %c0_18] : memref<1x128xf32, #tpu.memory_space<vmem>>, vector<1x128xf32>
      %21 = vector.broadcast %20 : vector<1x128xf32> to vector<8x128xf32>
      %22 = arith.addf %19, %21 : vector<8x128xf32>
      %c0_19 = arith.constant 0 : index
      %c0_20 = arith.constant 0 : index
      %23 = vector.load %arg6[%c0_19, %c0_20] : memref<8x128xf32, #tpu.memory_space<vmem>>, vector<8x128xf32>
      tpu.vector_store %arg6[%c0_19, %c0_20], %22 {strides = array<i32>} : memref<8x128xf32, #tpu.memory_space<vmem>>, vector<8x128xf32>,
    } else {
    }
    return
  }
  func.func @transform_0(%arg0: i32) -> (i32, i32) {
    %c0_i32 = arith.constant 0 : i32
    %c0_i32_0 = arith.constant 0 : i32
    %c0_i32_1 = arith.constant 0 : i32
    return %c0_i32, %c0_i32_0 : i32, i32
  }
  func.func @transform_1(%arg0: i32) -> (i32, i32) {
    %c0_i32 = arith.constant 0 : i32
    %c0_i32_0 = arith.constant 0 : i32
    return %c0_i32, %arg0 : i32, i32
  }
  func.func @transform_2(%arg0: i32) -> (i32, i32) {
    %c0_i32 = arith.constant 0 : i32
    %c0_i32_0 = arith.constant 0 : i32
    return %c0_i32, %arg0 : i32, i32
  }
  func.func @transform_3(%arg0: i32) -> (i32, i32) {
    %c0_i32 = arith.constant 0 : i32
    %c0_i32_0 = arith.constant 0 : i32
    return %arg0, %c0_i32 : i32, i32
  }
  func.func @transform_4(%arg0: i32) -> (i32, i32) {
    %c0_i32 = arith.constant 0 : i32
    %c0_i32_0 = arith.constant 0 : i32
    %c0_i32_1 = arith.constant 0 : i32
    return %c0_i32, %c0_i32_0 : i32, i32
  }
  func.func @transform_5(%arg0: i32) -> (i32, i32) {
    %c0_i32 = arith.constant 0 : i32
    %c0_i32_0 = arith.constant 0 : i32
    %c0_i32_1 = arith.constant 0 : i32
    return %c0_i32, %c0_i32_0 : i32, i32
  }
}

</mosaic_0001>

<llo_original>
// kernel: tpu_custom_call.1
$region0: #{tpu_custom_call.1}
  #allocation0 [shape = 'u32[]', space=smem, size = 0x4, offset = 0x4, fixed_abs, tag = 'smem constant byte address 0x4 - core index']
  #allocation1 [shape = 'u32[144,128]{1,0:T(1,128)}', space=vmem, size = 0x12000, scoped, tag = 'internal scratch']
  #allocation2 [shape = 'f32[8,128]{1,0:T(8,128)}', space=vmem, size = 0x1000, scoped, tag = 'scratch operand']
  %s0 = inlined_call_operand.hbm [shape: bf16[8,32], index: 0, kind: input, shape index: {}]
  %s1 = inlined_call_operand.hbm [shape: bf16[32,32], index: 1, kind: input, shape index: {}]
  %s2 = inlined_call_operand.vmem [shape: f32[1,32], index: 2, kind: input, shape index: {}]
  %s3 = inlined_call_operand.hbm [shape: bf16[32,128], index: 3, kind: input, shape index: {}]
  %s4 = inlined_call_operand.vmem [shape: f32[1,128], index: 4, kind: input, shape index: {}]
  %s5 = inlined_call_operand.hbm [shape: f32[8,128], index: 5, kind: output, shape index: {}]
  %s6 = sld [smem:[#allocation0]]
  $region50: #{tpu_custom_call.1} parent=0
    _
  %s8 = ssub.s32 1, %s6
  %s9 = scalar_select 0, %s8, %s6
  $region1: #{tpu_custom_call.1} parent=0
    #allocation3 [shape = 'u8[2048]{0}', space=vmem, size = 0x800, scoped, tag = 'input window, operand 0, single buffered']
    #allocation4 [shape = 's32[1]{0}', space=sflag, size = 0x4, scoped, tag = 'scoped memory for tpu_custom_call.1']
    #allocation5 [shape = 's32[1]{0}', space=sflag, size = 0x4, scoped, tag = 'scoped memory for tpu_custom_call.1']
    #allocation6 [shape = 'u8[8192]{0}', space=vmem, size = 0x2000, scoped, tag = 'input window, operand 1, single buffered']
    #allocation7 [shape = 's32[1]{0}', space=sflag, size = 0x4, scoped, tag = 'scoped memory for tpu_custom_call.1']
    #allocation8 [shape = 'u8[8192]{0}', space=vmem, size = 0x2000, scoped, tag = 'input window, operand 3, single buffered']
    #allocation9 [shape = 'u8[4096]{0}', space=vmem, size = 0x1000, scoped, tag = 'output window, operand 0, single buffered']
    %10 = vsyncpa [#allocation4], 0
    %11 = vsyncpa [#allocation7], 0
    %12 = vsyncpa [#allocation5], 0
    // Predicated region
    $region2: #{tpu_custom_call.1} parent=1 // pred_check
      _
    $region3: #{tpu_custom_call.1} parent=1 // pred_check_branch
      %14 = sbr.rel (0) target = $region5
    $region4: #{tpu_custom_call.1} parent=1 // pred_region
      %s16 = ssub.s32 64, 64
      %17 = vsyncadd [#allocation4], %s16
      %s19 = sshll.u32 [#allocation3], 4
      %s20 = int_to_ptr.vmem [resolvable:$true] %s19
      %22 = dma.hbm_to_vmem [thread:$0]  %s0, 64, %s20, [#allocation4]
    $region5: #{tpu_custom_call.1} parent=1 // pred_fallthru
      _
    // Predicated region
    $region6: #{tpu_custom_call.1} parent=1 // pred_check
      _
    $region7: #{tpu_custom_call.1} parent=1 // pred_check_branch
      %24 = sbr.rel (0) target = $region9
    $region8: #{tpu_custom_call.1} parent=1 // pred_region
      %s26 = ssub.s32 256, 256
      %27 = vsyncadd [#allocation7], %s26
      %s28 = sshll.u32 [#allocation6], 4
      %s29 = int_to_ptr.vmem [resolvable:$true] %s28
      %34 = dma.hbm_to_vmem [thread:$0]  %s1, 256, %s29, [#allocation7], 64, 64, 4
    $region9: #{tpu_custom_call.1} parent=1 // pred_fallthru
      _
    // Predicated region
    $region10: #{tpu_custom_call.1} parent=1 // pred_check
      _
    $region11: #{tpu_custom_call.1} parent=1 // pred_check_branch
      %36 = sbr.rel (0) target = $region13
    $region12: #{tpu_custom_call.1} parent=1 // pred_region
      _
    $region13: #{tpu_custom_call.1} parent=1 // pred_fallthru
      _
    // Predicated region
    $region14: #{tpu_custom_call.1} parent=1 // pred_check
      _
    $region15: #{tpu_custom_call.1} parent=1 // pred_check_branch
      %38 = sbr.rel (0) target = $region17
    $region16: #{tpu_custom_call.1} parent=1 // pred_region
      %s40 = ssub.s32 256, 256
      %41 = vsyncadd [#allocation7], %s40
      %s42 = sshll.u32 [#allocation8], 4
      %s43 = int_to_ptr.vmem [resolvable:$true] %s42
      %48 = dma.hbm_to_vmem [thread:$0]  %s3, 256, %s43, [#allocation7], 64, 64, 4
    $region17: #{tpu_custom_call.1} parent=1 // pred_fallthru
      _
    // Predicated region
    $region18: #{tpu_custom_call.1} parent=1 // pred_check
      _
    $region19: #{tpu_custom_call.1} parent=1 // pred_check_branch
      %50 = sbr.rel (0) target = $region21
    $region20: #{tpu_custom_call.1} parent=1 // pred_region
      _
    $region21: #{tpu_custom_call.1} parent=1 // pred_fallthru
      _
    // Predicated region
    $region22: #{tpu_custom_call.1} parent=1 // pred_check
      _
    $region23: #{tpu_custom_call.1} parent=1 // pred_check_branch
      %52 = sbr.rel (0) target = $region25
    $region24: #{tpu_custom_call.1} parent=1 // pred_region
      %53 = dma.done [#allocation4], 64
    $region25: #{tpu_custom_call.1} parent=1 // pred_fallthru
      _
    // Predicated region
    $region26: #{tpu_custom_call.1} parent=1 // pred_check
      _
    $region27: #{tpu_custom_call.1} parent=1 // pred_check_branch
      %55 = sbr.rel (0) target = $region29
    $region28: #{tpu_custom_call.1} parent=1 // pred_region
      %56 = dma.done [#allocation7], 256
    $region29: #{tpu_custom_call.1} parent=1 // pred_fallthru
      _
    // Predicated region
    $region30: #{tpu_custom_call.1} parent=1 // pred_check
      _
    $region31: #{tpu_custom_call.1} parent=1 // pred_check_branch
      %58 = sbr.rel (0) target = $region33
    $region32: #{tpu_custom_call.1} parent=1 // pred_region
      %59 = dma.done [#allocation7], 256
    $region33: #{tpu_custom_call.1} parent=1 // pred_fallthru
      _
    %p61 = scmp.eq.s32.totalorder 0, 0
    // Predicated region
    $region34: #{tpu_custom_call.1} parent=1 // pred_check
      %p62 = pneg %p61
    $region35: #{tpu_custom_call.1} parent=1 // pred_check_branch
      %64 = sbr.rel (%p62) target = $region37
    $region36: #{tpu_custom_call.1} parent=1 // pred_region
      %65 = vst [vmem:[#allocation2] sm:$0xff] 0.0
    $region37: #{tpu_custom_call.1} parent=1 // pred_fallthru
      _
    %v66 = vld [vmem:[#allocation3] sm:$0xf]
    %v67 = vld [vmem:[#allocation6] sm:$0xf]
    %v68 = vld [vmem:[#allocation6 + $0x4] sm:$0xf]
    %v69 = vld [vmem:[#allocation6 + $0x8] sm:$0xf]
    %v70 = vld [vmem:[#allocation6 + $0xc] sm:$0xf]
    %v71 = vld [vmem:[%s2] sm:$0x1]
    %v73 = vlaneseq
    %v74 = vshrl.u32 %v73, 7
    %v75 = vsub.s32 0, %v74
    %v76 = vrot.slane %v71, %v75
    %v82 = vunpack.c.l.b16 %v67
    %v83 = vunpack.c.l.b16 %v68
    %v84 = vunpack.c.l.b16 %v69
    %v85 = vunpack.c.l.b16 %v70
    %v86 = vpack.c.b16 %v83, %v82
    %v87 = vpack.c.b16 %v85, %v84
    %vm90 = vcmask 261120
    %v92 = vsel %vm90, %v66, 0
    %94 = vmatprep.subr.bf16.mxu0 0
    %95 = vmatpush1.bf16.msra.mxu0 %v86
    %96 = vmatprep.subr.bf16.mxu0 0
    %97 = vmatpush1.bf16.msra.mxu0 %v87
    %98 = vmatprep.subr.bf16.mxu0 0
    %99 = vmatpush1.bf16.msra.mxu0 0
    %100 = vmatprep.subr.bf16.mxu0 0
    %101 = vmatpush1.bf16.msra.mxu0 0
    %102 = vmatprep.subr.bf16.mxu0 0
    %103 = vmatpush1.bf16.msra.mxu0 0
    %104 = vmatprep.subr.bf16.mxu0 0
    %105 = vmatpush1.bf16.msra.mxu0 0
    %106 = vmatprep.subr.bf16.mxu0 0
    %107 = vmatpush1.bf16.msra.mxu0 0
    %108 = vmatprep.subr.bf16.mxu0 0
    %109 = vmatpush1.bf16.msra.mxu0 0
    %110 = vmatprep.subr.bf16.mxu0 0
    %111 = vmatpush1.bf16.msra.mxu0 0
    %112 = vmatprep.subr.bf16.mxu0 0
    %113 = vmatpush1.bf16.msra.mxu0 0
    %114 = vmatprep.subr.bf16.mxu0 0
    %115 = vmatpush1.bf16.msra.mxu0 0
    %116 = vmatprep.subr.bf16.mxu0 0
    %117 = vmatpush1.bf16.msra.mxu0 0
    %118 = vmatprep.subr.bf16.mxu0 0
    %119 = vmatpush1.bf16.msra.mxu0 0
    %120 = vmatprep.subr.bf16.mxu0 0
    %121 = vmatpush1.bf16.msra.mxu0 0
    %122 = vmatprep.subr.bf16.mxu0 0
    %123 = vmatpush1.bf16.msra.mxu0 0
    %124 = vmatprep.subr.bf16.mxu0 0
    %125 = vmatpush1.bf16.msra.mxu0 0
    %126 = vmatprep.mubr.bf16.mxu0 0
    %127 = vmatmul.mubr.bf16.gmra.mrb[0].mxu0 %v92
    %v128 = vpop.f32.mrb[0].mxu0
    %v129 = vadd.f32 %v76, %v128
    %v130 = vpop.f32.mrb[0].mxu0
    %v131 = vpop.f32.mrb[0].mxu0
    %v132 = vpop.f32.mrb[0].mxu0
    %133 = vdwg.mxu0
    %v134 = vtanh.pop %v129
    %v135 = vld [vmem:[#allocation2] sm:$0xff]
    %v136 = vpack.c.bf16 %v134, %v134
    %v137 = vld [vmem:[#allocation8] sm:$0xf]
    %v138 = vld [vmem:[#allocation8 + $0x4] sm:$0xf]
    %v139 = vld [vmem:[#allocation8 + $0x8] sm:$0xf]
    %v140 = vld [vmem:[#allocation8 + $0xc] sm:$0xf]
    %v145 = vunpack.c.l.b16 %v137
    %v146 = vunpack.c.l.b16 %v138
    %v147 = vunpack.c.l.b16 %v139
    %v148 = vunpack.c.l.b16 %v140
    %v149 = vpack.c.b16 %v146, %v145
    %v150 = vpack.c.b16 %v148, %v147
    %v154 = vsel %vm90, %v136, 0
    %156 = vmatprep.subr.bf16.mxu0 0
    %157 = vmatpush1.bf16.msra.mxu0 %v149
    %158 = vmatprep.subr.bf16.mxu0 0
    %159 = vmatpush1.bf16.msra.mxu0 %v150
    %160 = vmatprep.subr.bf16.mxu0 0
    %161 = vmatpush1.bf16.msra.mxu0 0
    %162 = vmatprep.subr.bf16.mxu0 0
    %163 = vmatpush1.bf16.msra.mxu0 0
    %164 = vmatprep.subr.bf16.mxu0 0
    %165 = vmatpush1.bf16.msra.mxu0 0
    %166 = vmatprep.subr.bf16.mxu0 0
    %167 = vmatpush1.bf16.msra.mxu0 0
    %168 = vmatprep.subr.bf16.mxu0 0
    %169 = vmatpush1.bf16.msra.mxu0 0
    %170 = vmatprep.subr.bf16.mxu0 0
    %171 = vmatpush1.bf16.msra.mxu0 0
    %172 = vmatprep.subr.bf16.mxu0 0
    %173 = vmatpush1.bf16.msra.mxu0 0
    %174 = vmatprep.subr.bf16.mxu0 0
    %175 = vmatpush1.bf16.msra.mxu0 0
    %176 = vmatprep.subr.bf16.mxu0 0
    %177 = vmatpush1.bf16.msra.mxu0 0
    %178 = vmatprep.subr.bf16.mxu0 0
    %179 = vmatpush1.bf16.msra.mxu0 0
    %180 = vmatprep.subr.bf16.mxu0 0
    %181 = vmatpush1.bf16.msra.mxu0 0
    %182 = vmatprep.subr.bf16.mxu0 0
    %183 = vmatpush1.bf16.msra.mxu0 0
    %184 = vmatprep.subr.bf16.mxu0 0
    %185 = vmatpush1.bf16.msra.mxu0 0
    %186 = vmatprep.subr.bf16.mxu0 0
    %187 = vmatpush1.bf16.msra.mxu0 0
    %188 = vmatprep.mubr.bf16.mxu0 0
    %189 = vmatmul.mubr.bf16.gmra.mrb[0].mxu0 %v154
    %v190 = vpop.f32.mrb[0].mxu0
    %v191 = vadd.f32 0.0, %v190
    %v192 = vpop.f32.mrb[0].mxu0
    %v193 = vpop.f32.mrb[0].mxu0
    %v194 = vpop.f32.mrb[0].mxu0
    %195 = vdwg.mxu0
    %v196 = vadd.f32 %v135, %v191
    %197 = vst [vmem:[#allocation2] sm:$0xff] %v196
    // Predicated region
    $region38: #{tpu_custom_call.1} parent=1 // pred_check
      %p198 = pneg %p61
    $region39: #{tpu_custom_call.1} parent=1 // pred_check_branch
      %200 = sbr.rel (%p198) target = $region41
    $region40: #{tpu_custom_call.1} parent=1 // pred_region
      %v201 = vld [vmem:[#allocation2] sm:$0xff]
      %v202 = vld [vmem:[%s4] sm:$0x1]
      %v204 = vlaneseq
      %v205 = vshrl.u32 %v204, 7
      %v206 = vsub.s32 0, %v205
      %v207 = vrot.slane %v202, %v206
      %v209 = vadd.f32 %v201, %v207
      %210 = vst [vmem:[#allocation9] sm:$0xff] %v209
    $region41: #{tpu_custom_call.1} parent=1 // pred_fallthru
      _
    // Predicated region
    $region42: #{tpu_custom_call.1} parent=1 // pred_check
      _
    $region43: #{tpu_custom_call.1} parent=1 // pred_check_branch
      %212 = sbr.rel (0) target = $region45
    $region44: #{tpu_custom_call.1} parent=1 // pred_region
      %s214 = ssub.s32 128, 128
      %215 = vsyncadd [#allocation5], %s214
      %s217 = sshll.u32 [#allocation9], 4
      %s218 = int_to_ptr.vmem [resolvable:$true] %s217
      %220 = dma.vmem_to_hbm [thread:$0]  %s218, 128, %s5, [#allocation5]
    $region45: #{tpu_custom_call.1} parent=1 // pred_fallthru
      _
    // Predicated region
    $region46: #{tpu_custom_call.1} parent=1 // pred_check
      _
    $region47: #{tpu_custom_call.1} parent=1 // pred_check_branch
      %222 = sbr.rel (0) target = $region49
    $region48: #{tpu_custom_call.1} parent=1 // pred_region
      %223 = dma.done [#allocation5], 128
    $region49: #{tpu_custom_call.1} parent=1 // pred_fallthru
      _
    %224 = vsyncpa [#allocation4], 1
    %225 = vsyncpa [#allocation7], 1
    %226 = vsyncpa [#allocation5], 1

</llo_original>
